<compile_context>
chip_gen: v7x
topology: tpu7x:2x2x1
jax: 0.10.0
libtpu: 0.0.40
codegen_flags: <defaults>
</compile_context>

<pallas_src>
import jax
import jax.numpy as jnp
from jax.experimental import pallas as pl
from jax.experimental.pallas import tpu as pltpu


def _round_up(x: int, m: int) -> int:
    return ((x + m - 1) // m) * m


def _gather_chunk_kernel(ids_ref, emb_ref, out_ref):
    """Gather G embedding rows via a one-hot matmul on the MXU.

    ids_ref : (1, 1, G) int32  -- indices for this chunk
    emb_ref : (V, H)           -- full table, VMEM-resident (constant index_map)
    out_ref : (G, H)           -- dense output tile
    """
    ids = ids_ref[0]                                    # (1, G) int32
    V = emb_ref.shape[0]
    G = ids.shape[-1]

    # one_hot[v, g] = (ids[g] == v); (1, G) broadcasts along the sublane (V) dim.
    row_iota = jax.lax.broadcasted_iota(jnp.int32, (V, G), 0)
    one_hot = (row_iota == ids).astype(emb_ref.dtype)   # (V, G)

    # (G, V) @ (V, H) on the MXU; exact row-selection for 0/1 weights.
    sel = one_hot.T                                     # XLU transpose (off the VALU)
    gathered = jnp.dot(
        sel,
        emb_ref[...],
        preferred_element_type=jnp.float32,
        precision=jax.lax.Precision.HIGHEST,            # keep f32 rows bit-faithful
    )
    out_ref[...] = gathered.astype(out_ref.dtype)


def know_concat_pallas(know: jax.Array, emb_weight: jax.Array, *, chunk: int = 512) -> jax.Array:
    """Pallas embedding gather: out[b, s] = emb_weight[know[b, s]]."""
    B, S = know.shape
    V, H = emb_weight.shape
    flat = know.reshape(-1).astype(jnp.int32)
    N = flat.shape[0]

    # Chunk size: multiple of 128 (lane/sublane friendly); default 512 rows at
    # H=128 f32 gives 256 KiB output tiles, enough to approach the HBM roofline.
    G = min(_round_up(chunk, 128), _round_up(N, 128))
    n_pad = _round_up(N, G)
    if n_pad != N:
        # Pad with index 0 (always valid); padded rows are sliced off below.
        flat = jnp.concatenate([flat, jnp.zeros((n_pad - N,), jnp.int32)])
    num_chunks = n_pad // G
    ids3d = flat.reshape(num_chunks, 1, G)

    # Note: out-of-range indices produce all-zero rows here (torch.nn.Embedding
    # would raise); clamp/validate in the caller if that matters.
    out_flat = pl.pallas_call(
        _gather_chunk_kernel,
        out_shape=jax.ShapeDtypeStruct((n_pad, H), emb_weight.dtype),
        grid_spec=pltpu.PrefetchScalarGridSpec(
            num_scalar_prefetch=0,
            grid=(num_chunks,),
            in_specs=[
                # Per-chunk indices: (1, 1, G) block, lane-dense last dim.
                pl.BlockSpec((1, 1, G), lambda i: (i, 0, 0)),
                # Full embedding table resident in VMEM (block index never changes).
                pl.BlockSpec((V, H), lambda i: (0, 0)),
            ],
            # Dense (G, H) output tiles: unmasked full-tile stores + large writeback DMAs.
            out_specs=pl.BlockSpec((G, H), lambda i: (i, 0)),
        ),
        compiler_params=pltpu.CompilerParams(
            # Chunks are fully independent -> shard across TensorCores on v7x.
            dimension_semantics=("parallel",),
        ),
    )(ids3d, emb_weight)

    return out_flat[:N].reshape(B, S, H)


def know_concat_forward(know: jax.Array, emb_weight: jax.Array, *,
                        use_pallas=None, chunk: int = 512) -> jax.Array:
    """KnowConcat.forward.  For tiny lookups XLA's native gather is already
    optimal, so only dispatch the Pallas kernel above a size threshold
    (or when explicitly forced)."""
    B, S = know.shape
    _, H = emb_weight.shape
    if use_pallas is None:
        out_bytes = B * S * H * jnp.dtype(emb_weight.dtype).itemsize
        use_pallas = out_bytes >= (1 << 20)
    if not use_pallas:
        return jnp.take(emb_weight, know.astype(jnp.int32), axis=0)
    return know_concat_pallas(know, emb_weight, chunk=chunk)


def make_know_concat_params(know_len: int, hidden_size: int, padding_layers: int,
                            key: jax.Array, dtype=jnp.float32) -> jax.Array:
    """Deterministic stand-in for torch.nn.Embedding weight init.
    (reset_params in the PyTorch module is just a weight setter -> pass a new
    weight array to the forward functions here.)"""
    vocab = 2 * padding_layers * know_len
    return jax.random.normal(key, (vocab, hidden_size), dtype=dtype)


if __name__ == "__main__":
    # Small shapes consistent with the module.
    know_len = 4
    padding_layers = 6
    hidden_size = 128

    root = jax.random.PRNGKey(0)
    k_w, k_idx1, k_idx2 = jax.random.split(root, 3)

    emb_weight = make_know_concat_params(know_len, hidden_size, padding_layers, k_w)
    vocab = emb_weight.shape[0]  # 2 * 6 * 4 = 48

    # Case 1: tiny lookup (single padded chunk) -- force the Pallas path so the
    # kernel is exercised even below the dispatch threshold.
    know_small = jax.random.randint(k_idx1, (2, 8), minval=0, maxval=vocab,
                                    dtype=jnp.int32)
    out_small = jax.block_until_ready(
        know_concat_forward(know_small, emb_weight, use_pallas=True))
    ref_small = jnp.take(emb_weight, know_small, axis=0)
    assert out_small.shape == (2, 8, hidden_size)
    assert jnp.allclose(out_small, ref_small, atol=1e-4, rtol=1e-4), \
        "Pallas gather mismatch vs reference (small case)"

    # Case 2: multi-chunk grid with index padding (N=1000 -> two chunks of 512).
    know_big = jax.random.randint(k_idx2, (4, 250), minval=0, maxval=vocab,
                                  dtype=jnp.int32)
    out_big = jax.block_until_ready(
        know_concat_forward(know_big, emb_weight, use_pallas=True))
    ref_big = jnp.take(emb_weight, know_big, axis=0)
    assert out_big.shape == (4, 250, hidden_size)
    assert jnp.allclose(out_big, ref_big, atol=1e-4, rtol=1e-4), \
        "Pallas gather mismatch vs reference (multi-chunk case)"

    print("KERNEL_OK")
</pallas_src>

<mosaic_0001>
module attributes {stable_mosaic.version = 11 : i64} {
  func.func @_gather_chunk_kernel(%arg0: i32, %arg1: memref<1x1x128xi32, #tpu.memory_space<vmem>>, %arg2: memref<48x128xf32, #tpu.memory_space<vmem>>, %arg3: memref<128x128xf32, #tpu.memory_space<vmem>>) attributes {dimension_semantics = [#tpu.dimension_semantics<parallel>], iteration_bounds = array<i64: 1>, scalar_prefetch = 0 : i64, scratch_operands = 0 : i64, tpu.core_type = #tpu.core_type<tc>, window_params = [{transform_indices = @transform_0, window_bounds = array<i64: 1, 1, 128>}, {pipeline_mode = #tpu.pipeline_mode<synchronous>, transform_indices = @transform_1, window_bounds = array<i64: 48, 128>}, {transform_indices = @transform_2, window_bounds = array<i64: 128, 128>}]} {
    %c0 = arith.constant 0 : index
    %c0_0 = arith.constant 0 : index
    %c0_1 = arith.constant 0 : index
    %0 = vector.load %arg1[%c0, %c0_0, %c0_1] : memref<1x1x128xi32, #tpu.memory_space<vmem>>, vector<1x1x128xi32>
    %1 = vector.shape_cast %0 : vector<1x1x128xi32> to vector<1x128xi32>
    %2 = tpu.iota {dimensions = array<i32: 0>} : vector<48x128xi32>
    %3 = vector.broadcast %1 : vector<1x128xi32> to vector<48x128xi32>
    %4 = arith.cmpi eq, %2, %3 : vector<48x128xi32>
    %5 = arith.extui %4 : vector<48x128xi1> to vector<48x128xi32>
    %6 = arith.sitofp %5 : vector<48x128xi32> to vector<48x128xf32>
    %7 = tpu.transpose %6, [1, 0] : vector<48x128xf32> -> vector<128x48xf32>
    %c0_2 = arith.constant 0 : index
    %c0_3 = arith.constant 0 : index
    %8 = vector.load %arg2[%c0_2, %c0_3] : memref<48x128xf32, #tpu.memory_space<vmem>>, vector<48x128xf32>
    %cst = arith.constant dense<0.000000e+00> : vector<128x128xf32>
    %9 = tpu.matmul %7, %8, %cst {dimension_numbers = #tpu.dot_dimension_numbers<[1], [0], [0], [1], [0, 0, 1, 1], [], []>, precision = #tpu.contract_precision<fp32>} : vector<128x48xf32>, vector<48x128xf32>, vector<128x128xf32> -> vector<128x128xf32>
    %c0_4 = arith.constant 0 : index
    %c0_5 = arith.constant 0 : index
    %10 = vector.load %arg3[%c0_4, %c0_5] : memref<128x128xf32, #tpu.memory_space<vmem>>, vector<128x128xf32>
    tpu.vector_store %arg3[%c0_4, %c0_5], %9 {strides = array<i32>} : memref<128x128xf32, #tpu.memory_space<vmem>>, vector<128x128xf32>,
    return
  }
  func.func @transform_0(%arg0: i32) -> (i32, i32, i32) {
    %c0_i32 = arith.constant 0 : i32
    %c0_i32_0 = arith.constant 0 : i32
    %c0_i32_1 = arith.constant 0 : i32
    return %arg0, %c0_i32, %c0_i32_0 : i32, i32, i32
  }
  func.func @transform_1(%arg0: i32) -> (i32, i32) {
    %c0_i32 = arith.constant 0 : i32
    %c0_i32_0 = arith.constant 0 : i32
    %c0_i32_1 = arith.constant 0 : i32
    return %c0_i32, %c0_i32_0 : i32, i32
  }
  func.func @transform_2(%arg0: i32) -> (i32, i32) {
    %c0_i32 = arith.constant 0 : i32
    %c0_i32_0 = arith.constant 0 : i32
    return %arg0, %c0_i32 : i32, i32
  }
}

</mosaic_0001>

<llo_original>
// kernel: tpu_custom_call.1
$region0: #{tpu_custom_call.1}
  #allocation0 [shape = 'u32[]', space=smem, size = 0x4, offset = 0x4, fixed_abs, tag = 'smem constant byte address 0x4 - core index']
  #allocation1 [shape = 'u32[144,128]{1,0:T(1,128)}', space=vmem, size = 0x12000, scoped, tag = 'internal scratch']
  %s0 = inlined_call_operand.hbm [shape: s32[1,1,128], index: 0, kind: input, shape index: {}]
  %s1 = inlined_call_operand.hbm [shape: f32[48,128], index: 1, kind: input, shape index: {}]
  %s2 = inlined_call_operand.hbm [shape: f32[128,128], index: 2, kind: output, shape index: {}]
  %s3 = sld [smem:[#allocation0]]
  $region26: #{tpu_custom_call.1} parent=0
    _
  %s5 = ssub.s32 1, %s3
  %s6 = scalar_select 0, %s5, %s3
  $region1: #{tpu_custom_call.1} parent=0
    #allocation2 [shape = 'u8[512]{0}', space=vmem, size = 0x400, scoped, tag = 'input window, operand 0, single buffered']
    #allocation3 [shape = 's32[1]{0}', space=sflag, size = 0x4, scoped, tag = 'scoped memory for tpu_custom_call.1']
    #allocation4 [shape = 's32[1]{0}', space=sflag, size = 0x4, scoped, tag = 'scoped memory for tpu_custom_call.1']
    #allocation5 [shape = 'u8[24576]{0}', space=vmem, size = 0x6000, scoped, tag = 'input window, operand 1, single buffered']
    #allocation6 [shape = 's32[1]{0}', space=sflag, size = 0x4, scoped, tag = 'scoped memory for tpu_custom_call.1']
    #allocation7 [shape = 'u8[65536]{0}', space=vmem, size = 0x10000, scoped, tag = 'output window, operand 0, single buffered']
    %7 = vsyncpa [#allocation3], 0
    %8 = vsyncpa [#allocation6], 0
    %9 = vsyncpa [#allocation4], 0
    // Predicated region
    $region2: #{tpu_custom_call.1} parent=1 // pred_check
      _
    $region3: #{tpu_custom_call.1} parent=1 // pred_check_branch
      %11 = sbr.rel (0) target = $region5
    $region4: #{tpu_custom_call.1} parent=1 // pred_region
      %s13 = ssub.s32 16, 16
      %14 = vsyncadd [#allocation3], %s13
      %s16 = sshll.u32 [#allocation2], 4
      %s17 = int_to_ptr.vmem [resolvable:$true] %s16
      %19 = dma.hbm_to_vmem [thread:$0]  %s0, 16, %s17, [#allocation3]
    $region5: #{tpu_custom_call.1} parent=1 // pred_fallthru
      _
    // Predicated region
    $region6: #{tpu_custom_call.1} parent=1 // pred_check
      _
    $region7: #{tpu_custom_call.1} parent=1 // pred_check_branch
      %21 = sbr.rel (0) target = $region9
    $region8: #{tpu_custom_call.1} parent=1 // pred_region
      %s23 = ssub.s32 768, 768
      %24 = vsyncadd [#allocation6], %s23
      %s25 = sshll.u32 [#allocation5], 4
      %s26 = int_to_ptr.vmem [resolvable:$true] %s25
      %31 = dma.hbm_to_vmem [thread:$0]  %s1, 768, %s26, [#allocation6], 128, 128, 8
    $region9: #{tpu_custom_call.1} parent=1 // pred_fallthru
      _
    // Predicated region
    $region10: #{tpu_custom_call.1} parent=1 // pred_check
      _
    $region11: #{tpu_custom_call.1} parent=1 // pred_check_branch
      %33 = sbr.rel (0) target = $region13
    $region12: #{tpu_custom_call.1} parent=1 // pred_region
      %34 = dma.done [#allocation3], 16
    $region13: #{tpu_custom_call.1} parent=1 // pred_fallthru
      _
    // Predicated region
    $region14: #{tpu_custom_call.1} parent=1 // pred_check
      _
    $region15: #{tpu_custom_call.1} parent=1 // pred_check_branch
      %36 = sbr.rel (0) target = $region17
    $region16: #{tpu_custom_call.1} parent=1 // pred_region
      %37 = dma.done [#allocation6], 768
    $region17: #{tpu_custom_call.1} parent=1 // pred_fallthru
      _
    %v38 = vld [vmem:[#allocation2] sm:$0x1]
    %v39 = vlaneseq
    %v40 = vshrl.u32 %v39, 7
    %v41 = vadd.s32 %v40, 8
    %v42 = vadd.s32 %v40, 16
    %v43 = vadd.s32 %v40, 24
    %v44 = vadd.s32 %v40, 32
    %v45 = vadd.s32 %v40, 40
    %v46 = vlaneseq
    %v47 = vshrl.u32 %v46, 7
    %v48 = vsub.s32 0, %v47
    %v49 = vrot.slane %v38, %v48
    %vm50 = vcmp.eq.s32.totalorder %v40, %v49
    %vm51 = vcmp.eq.s32.totalorder %v41, %v49
    %vm52 = vcmp.eq.s32.totalorder %v42, %v49
    %vm53 = vcmp.eq.s32.totalorder %v43, %v49
    %vm54 = vcmp.eq.s32.totalorder %v44, %v49
    %vm55 = vcmp.eq.s32.totalorder %v45, %v49
    %v56 = vsel %vm50, 1, 0
    %v57 = vsel %vm51, 1, 0
    %v58 = vsel %vm52, 1, 0
    %v59 = vsel %vm53, 1, 0
    %v60 = vsel %vm54, 1, 0
    %v61 = vsel %vm55, 1, 0
    %v62 = vcvt.s32.f32 %v56
    %v63 = vcvt.s32.f32 %v57
    %v64 = vcvt.s32.f32 %v58
    %v65 = vcvt.s32.f32 %v59
    %v66 = vcvt.s32.f32 %v60
    %v67 = vcvt.s32.f32 %v61
    %68 = vxpose.xlu0.b32.start [1/16] %v62, 128
    %69 = vxpose.xlu0.b32.cont [2/16] %v63, 128
    %70 = vxpose.xlu0.b32.cont [3/16] %v64, 128
    %71 = vxpose.xlu0.b32.cont [4/16] %v65, 128
    %72 = vxpose.xlu0.b32.cont [5/16] %v66, 128
    %73 = vxpose.xlu0.b32.cont [6/16] %v67, 128
    %74 = vxpose.xlu0.b32.cont [7/16] 0.0, 128
    %75 = vxpose.xlu0.b32.cont [8/16] 0.0, 128
    %76 = vxpose.xlu0.b32.cont [9/16] 0.0, 128
    %77 = vxpose.xlu0.b32.cont [10/16] 0.0, 128
    %78 = vxpose.xlu0.b32.cont [11/16] 0.0, 128
    %79 = vxpose.xlu0.b32.cont [12/16] 0.0, 128
    %80 = vxpose.xlu0.b32.cont [13/16] 0.0, 128
    %81 = vxpose.xlu0.b32.cont [14/16] 0.0, 128
    %82 = vxpose.xlu0.b32.cont [15/16] 0.0, 128
    %83 = vxpose.xlu0.b32.end [16/16] 0.0, 128
    %v84 = vpop.trf.xlu0
    %v85 = vpop.trf.xlu0
    %v86 = vpop.trf.xlu0
    %v87 = vpop.trf.xlu0
    %v88 = vpop.trf.xlu0
    %v89 = vpop.trf.xlu0
    %v90 = vpop.trf.xlu0
    %v91 = vpop.trf.xlu0
    %v92 = vpop.trf.xlu0
    %v93 = vpop.trf.xlu0
    %v94 = vpop.trf.xlu0
    %v95 = vpop.trf.xlu0
    %v96 = vpop.trf.xlu0
    %v97 = vpop.trf.xlu0
    %v98 = vpop.trf.xlu0
    %v99 = vpop.trf.xlu0
    %v100 = vld [vmem:[#allocation5] sm:$0xff]
    %v101 = vld [vmem:[#allocation5 + $0x8] sm:$0xff]
    %v102 = vld [vmem:[#allocation5 + $0x10] sm:$0xff]
    %v103 = vld [vmem:[#allocation5 + $0x18] sm:$0xff]
    %v104 = vld [vmem:[#allocation5 + $0x20] sm:$0xff]
    %v105 = vld [vmem:[#allocation5 + $0x28] sm:$0xff]
    %vm106 = vcmask 392192
    %v108 = vsel %vm106, %v84, 0
    %v111 = vsel %vm106, %v85, 0
    %v114 = vsel %vm106, %v86, 0
    %v117 = vsel %vm106, %v87, 0
    %v120 = vsel %vm106, %v88, 0
    %v123 = vsel %vm106, %v89, 0
    %v126 = vsel %vm106, %v90, 0
    %v129 = vsel %vm106, %v91, 0
    %v132 = vsel %vm106, %v92, 0
    %v135 = vsel %vm106, %v93, 0
    %v138 = vsel %vm106, %v94, 0
    %v141 = vsel %vm106, %v95, 0
    %v144 = vsel %vm106, %v96, 0
    %v147 = vsel %vm106, %v97, 0
    %v150 = vsel %vm106, %v98, 0
    %v153 = vsel %vm106, %v99, 0
    %155 = vmatprep.subr.mxu0 0.0
    %v156 = vand.u32 %v100, 4294901760
    %157 = vmatpush1.msra.mxu0 %v156
    %158 = vmatprep.subr.mxu0 0.0
    %v159 = vand.u32 %v101, 4294901760
    %160 = vmatpush1.msra.mxu0 %v159
    %161 = vmatprep.subr.mxu0 0.0
    %v162 = vand.u32 %v102, 4294901760
    %163 = vmatpush1.msra.mxu0 %v162
    %164 = vmatprep.subr.mxu0 0.0
    %v165 = vand.u32 %v103, 4294901760
    %166 = vmatpush1.msra.mxu0 %v165
    %167 = vmatprep.subr.mxu0 0.0
    %v168 = vand.u32 %v104, 4294901760
    %169 = vmatpush1.msra.mxu0 %v168
    %170 = vmatprep.subr.mxu0 0.0
    %v171 = vand.u32 %v105, 4294901760
    %172 = vmatpush1.msra.mxu0 %v171
    %173 = vmatprep.subr.mxu0 0.0
    %174 = vmatpush1.msra.mxu0 0.0
    %175 = vmatprep.subr.mxu0 0.0
    %176 = vmatpush1.msra.mxu0 0.0
    %177 = vmatprep.subr.mxu0 0.0
    %178 = vmatpush1.msra.mxu0 0.0
    %179 = vmatprep.subr.mxu0 0.0
    %180 = vmatpush1.msra.mxu0 0.0
    %181 = vmatprep.subr.mxu0 0.0
    %182 = vmatpush1.msra.mxu0 0.0
    %183 = vmatprep.subr.mxu0 0.0
    %184 = vmatpush1.msra.mxu0 0.0
    %185 = vmatprep.subr.mxu0 0.0
    %186 = vmatpush1.msra.mxu0 0.0
    %187 = vmatprep.subr.mxu0 0.0
    %188 = vmatpush1.msra.mxu0 0.0
    %189 = vmatprep.subr.mxu0 0.0
    %190 = vmatpush1.msra.mxu0 0.0
    %191 = vmatprep.subr.mxu0 0.0
    %192 = vmatpush1.msra.mxu0 0.0
    %193 = vmatprep.subr.mxu0 0.0
    %194 = vmatpush1.msra.mxu0 0.0
    %195 = vmatprep.subr.mxu0 0.0
    %196 = vmatpush1.msra.mxu0 0.0
    %197 = vmatprep.subr.mxu0 0.0
    %198 = vmatpush1.msra.mxu0 0.0
    %199 = vmatprep.subr.mxu0 0.0
    %200 = vmatpush1.msra.mxu0 0.0
    %201 = vmatprep.subr.mxu0 0.0
    %202 = vmatpush1.msra.mxu0 0.0
    %203 = vmatprep.subr.mxu0 0.0
    %204 = vmatpush1.msra.mxu0 0.0
    %205 = vmatprep.subr.mxu0 0.0
    %206 = vmatpush1.msra.mxu0 0.0
    %207 = vmatprep.subr.mxu0 0.0
    %208 = vmatpush1.msra.mxu0 0.0
    %209 = vmatprep.subr.mxu0 0.0
    %210 = vmatpush1.msra.mxu0 0.0
    %211 = vmatprep.subr.mxu0 0.0
    %212 = vmatpush1.msra.mxu0 0.0
    %213 = vmatprep.subr.mxu0 0.0
    %214 = vmatpush1.msra.mxu0 0.0
    %215 = vmatprep.subr.mxu0 0.0
    %216 = vmatpush1.msra.mxu0 0.0
    %217 = vmatprep.subr.mxu0 0.0
    %218 = vmatpush1.msra.mxu0 0.0
    %219 = vmatprep.subr.mxu0 0.0
    %220 = vmatpush1.msra.mxu0 0.0
    %221 = vmatprep.subr.mxu0 0.0
    %222 = vmatpush1.msra.mxu0 0.0
    %223 = vmatprep.subr.mxu0 0.0
    %224 = vmatpush1.msra.mxu0 0.0
    %225 = vmatprep.mubr.f32.mxu0 0.0
    %v226 = vand.u32 %v108, 4294901760
    %v227 = vsub.f32 %v108, %v226
    %v228 = vand.u32 %v227, 4294901760
    %v229 = vsub.f32 %v227, %v228
    %v230 = vand.u32 %v229, 4294901760
    %231 = vmatmul.mubr.f32.gmra.mrb[0].mxu0 %v230
    %v232 = vpop.f32.mrb[0].mxu0
    %v233 = vadd.f32 0.0, %v232
    %v234 = vpop.f32.mrb[0].mxu0
    %235 = vmatprep.mubr.f32.mxu0 0.0
    %v236 = vand.u32 %v111, 4294901760
    %v237 = vsub.f32 %v111, %v236
    %v238 = vand.u32 %v237, 4294901760
    %v239 = vsub.f32 %v237, %v238
    %v240 = vand.u32 %v239, 4294901760
    %241 = vmatmul.mubr.f32.gmra.mrb[0].mxu0 %v240
    %v242 = vpop.f32.mrb[0].mxu0
    %v243 = vadd.f32 0.0, %v242
    %v244 = vpop.f32.mrb[0].mxu0
    %245 = vmatprep.mubr.f32.mxu0 0.0
    %v246 = vand.u32 %v114, 4294901760
    %v247 = vsub.f32 %v114, %v246
    %v248 = vand.u32 %v247, 4294901760
    %v249 = vsub.f32 %v247, %v248
    %v250 = vand.u32 %v249, 4294901760
    %251 = vmatmul.mubr.f32.gmra.mrb[0].mxu0 %v250
    %v252 = vpop.f32.mrb[0].mxu0
    %v253 = vadd.f32 0.0, %v252
    %v254 = vpop.f32.mrb[0].mxu0
    %255 = vmatprep.mubr.f32.mxu0 0.0
    %v256 = vand.u32 %v117, 4294901760
    %v257 = vsub.f32 %v117, %v256
    %v258 = vand.u32 %v257, 4294901760
    %v259 = vsub.f32 %v257, %v258
    %v260 = vand.u32 %v259, 4294901760
    %261 = vmatmul.mubr.f32.gmra.mrb[0].mxu0 %v260
    %v262 = vpop.f32.mrb[0].mxu0
    %v263 = vadd.f32 0.0, %v262
    %v264 = vpop.f32.mrb[0].mxu0
    %265 = vmatprep.mubr.f32.mxu0 0.0
    %v266 = vand.u32 %v120, 4294901760
    %v267 = vsub.f32 %v120, %v266
    %v268 = vand.u32 %v267, 4294901760
    %v269 = vsub.f32 %v267, %v268
    %v270 = vand.u32 %v269, 4294901760
    %271 = vmatmul.mubr.f32.gmra.mrb[0].mxu0 %v270
    %v272 = vpop.f32.mrb[0].mxu0
    %v273 = vadd.f32 0.0, %v272
    %v274 = vpop.f32.mrb[0].mxu0
    %275 = vmatprep.mubr.f32.mxu0 0.0
    %v276 = vand.u32 %v123, 4294901760
    %v277 = vsub.f32 %v123, %v276
    %v278 = vand.u32 %v277, 4294901760
    %v279 = vsub.f32 %v277, %v278
    %v280 = vand.u32 %v279, 4294901760
    %281 = vmatmul.mubr.f32.gmra.mrb[0].mxu0 %v280
    %v282 = vpop.f32.mrb[0].mxu0
    %v283 = vadd.f32 0.0, %v282
    %v284 = vpop.f32.mrb[0].mxu0
    %285 = vmatprep.mubr.f32.mxu0 0.0
    %v286 = vand.u32 %v126, 4294901760
    %v287 = vsub.f32 %v126, %v286
    %v288 = vand.u32 %v287, 4294901760
    %v289 = vsub.f32 %v287, %v288
    %v290 = vand.u32 %v289, 4294901760
    %291 = vmatmul.mubr.f32.gmra.mrb[0].mxu0 %v290
    %v292 = vpop.f32.mrb[0].mxu0
    %v293 = vadd.f32 0.0, %v292
    %v294 = vpop.f32.mrb[0].mxu0
    %295 = vmatprep.mubr.f32.mxu0 0.0
    %v296 = vand.u32 %v129, 4294901760
    %v297 = vsub.f32 %v129, %v296
    %v298 = vand.u32 %v297, 4294901760
    %v299 = vsub.f32 %v297, %v298
    %v300 = vand.u32 %v299, 4294901760
    %301 = vmatmul.mubr.f32.gmra.mrb[0].mxu0 %v300
    %v302 = vpop.f32.mrb[0].mxu0
    %v303 = vadd.f32 0.0, %v302
    %v304 = vpop.f32.mrb[0].mxu0
    %305 = vmatprep.mubr.f32.mxu0 0.0
    %v306 = vand.u32 %v132, 4294901760
    %v307 = vsub.f32 %v132, %v306
    %v308 = vand.u32 %v307, 4294901760
    %v309 = vsub.f32 %v307, %v308
    %v310 = vand.u32 %v309, 4294901760
    %311 = vmatmul.mubr.f32.gmra.mrb[0].mxu0 %v310
    %v312 = vpop.f32.mrb[0].mxu0
    %v313 = vadd.f32 0.0, %v312
    %v314 = vpop.f32.mrb[0].mxu0
    %315 = vmatprep.mubr.f32.mxu0 0.0
    %v316 = vand.u32 %v135, 4294901760
    %v317 = vsub.f32 %v135, %v316
    %v318 = vand.u32 %v317, 4294901760
    %v319 = vsub.f32 %v317, %v318
    %v320 = vand.u32 %v319, 4294901760
    %321 = vmatmul.mubr.f32.gmra.mrb[0].mxu0 %v320
    %v322 = vpop.f32.mrb[0].mxu0
    %v323 = vadd.f32 0.0, %v322
    %v324 = vpop.f32.mrb[0].mxu0
    %325 = vmatprep.mubr.f32.mxu0 0.0
    %v326 = vand.u32 %v138, 4294901760
    %v327 = vsub.f32 %v138, %v326
    %v328 = vand.u32 %v327, 4294901760
    %v329 = vsub.f32 %v327, %v328
    %v330 = vand.u32 %v329, 4294901760
    %331 = vmatmul.mubr.f32.gmra.mrb[0].mxu0 %v330
    %v332 = vpop.f32.mrb[0].mxu0
    %v333 = vadd.f32 0.0, %v332
    %v334 = vpop.f32.mrb[0].mxu0
    %335 = vmatprep.mubr.f32.mxu0 0.0
    %v336 = vand.u32 %v141, 4294901760
    %v337 = vsub.f32 %v141, %v336
    %v338 = vand.u32 %v337, 4294901760
    %v339 = vsub.f32 %v337, %v338
    %v340 = vand.u32 %v339, 4294901760
    %341 = vmatmul.mubr.f32.gmra.mrb[0].mxu0 %v340
    %v342 = vpop.f32.mrb[0].mxu0
    %v343 = vadd.f32 0.0, %v342
    %v344 = vpop.f32.mrb[0].mxu0
    %345 = vmatprep.mubr.f32.mxu0 0.0
    %v346 = vand.u32 %v144, 4294901760
    %v347 = vsub.f32 %v144, %v346
    %v348 = vand.u32 %v347, 4294901760
    %v349 = vsub.f32 %v347, %v348
    %v350 = vand.u32 %v349, 4294901760
    %351 = vmatmul.mubr.f32.gmra.mrb[0].mxu0 %v350
    %v352 = vpop.f32.mrb[0].mxu0
    %v353 = vadd.f32 0.0, %v352
    %v354 = vpop.f32.mrb[0].mxu0
    %355 = vmatprep.mubr.f32.mxu0 0.0
    %v356 = vand.u32 %v147, 4294901760
    %v357 = vsub.f32 %v147, %v356
    %v358 = vand.u32 %v357, 4294901760
    %v359 = vsub.f32 %v357, %v358
    %v360 = vand.u32 %v359, 4294901760
    %361 = vmatmul.mubr.f32.gmra.mrb[0].mxu0 %v360
    %v362 = vpop.f32.mrb[0].mxu0
    %v363 = vadd.f32 0.0, %v362
    %v364 = vpop.f32.mrb[0].mxu0
    %365 = vmatprep.mubr.f32.mxu0 0.0
    %v366 = vand.u32 %v150, 4294901760
    %v367 = vsub.f32 %v150, %v366
    %v368 = vand.u32 %v367, 4294901760
    %v369 = vsub.f32 %v367, %v368
    %v370 = vand.u32 %v369, 4294901760
    %371 = vmatmul.mubr.f32.gmra.mrb[0].mxu0 %v370
    %v372 = vpop.f32.mrb[0].mxu0
    %v373 = vadd.f32 0.0, %v372
    %v374 = vpop.f32.mrb[0].mxu0
    %375 = vmatprep.mubr.f32.mxu0 0.0
    %v376 = vand.u32 %v153, 4294901760
    %v377 = vsub.f32 %v153, %v376
    %v378 = vand.u32 %v377, 4294901760
    %v379 = vsub.f32 %v377, %v378
    %v380 = vand.u32 %v379, 4294901760
    %381 = vmatmul.mubr.f32.gmra.mrb[0].mxu0 %v380
    %v382 = vpop.f32.mrb[0].mxu0
    %v383 = vadd.f32 0.0, %v382
    %v384 = vpop.f32.mrb[0].mxu0
    %385 = vdwg.mxu0
    %386 = vmatprep.subr.mxu0 0.0
    %v387 = vand.u32 %v100, 4294901760
    %v388 = vsub.f32 %v100, %v387
    %v389 = vand.u32 %v388, 4294901760
    %v390 = vsub.f32 %v388, %v389
    %v391 = vand.u32 %v390, 4294901760
    %392 = vmatpush1.msra.mxu0 %v391
    %393 = vmatprep.subr.mxu0 0.0
    %v394 = vand.u32 %v101, 4294901760
    %v395 = vsub.f32 %v101, %v394
    %v396 = vand.u32 %v395, 4294901760
    %v397 = vsub.f32 %v395, %v396
    %v398 = vand.u32 %v397, 4294901760
    %399 = vmatpush1.msra.mxu0 %v398
    %400 = vmatprep.subr.mxu0 0.0
    %v401 = vand.u32 %v102, 4294901760
    %v402 = vsub.f32 %v102, %v401
    %v403 = vand.u32 %v402, 4294901760
    %v404 = vsub.f32 %v402, %v403
    %v405 = vand.u32 %v404, 4294901760
    %406 = vmatpush1.msra.mxu0 %v405
    %407 = vmatprep.subr.mxu0 0.0
    %v408 = vand.u32 %v103, 4294901760
    %v409 = vsub.f32 %v103, %v408
    %v410 = vand.u32 %v409, 4294901760
    %v411 = vsub.f32 %v409, %v410
    %v412 = vand.u32 %v411, 4294901760
    %413 = vmatpush1.msra.mxu0 %v412
    %414 = vmatprep.subr.mxu0 0.0
    %v415 = vand.u32 %v104, 4294901760
    %v416 = vsub.f32 %v104, %v415
    %v417 = vand.u32 %v416, 4294901760
    %v418 = vsub.f32 %v416, %v417
    %v419 = vand.u32 %v418, 4294901760
    %420 = vmatpush1.msra.mxu0 %v419
    %421 = vmatprep.subr.mxu0 0.0
    %v422 = vand.u32 %v105, 4294901760
    %v423 = vsub.f32 %v105, %v422
    %v424 = vand.u32 %v423, 4294901760
    %v425 = vsub.f32 %v423, %v424
    %v426 = vand.u32 %v425, 4294901760
    %427 = vmatpush1.msra.mxu0 %v426
    %428 = vmatprep.subr.mxu0 0.0
    %429 = vmatpush1.msra.mxu0 0.0
    %430 = vmatprep.subr.mxu0 0.0
    %431 = vmatpush1.msra.mxu0 0.0
    %432 = vmatprep.subr.mxu0 0.0
    %433 = vmatpush1.msra.mxu0 0.0
    %434 = vmatprep.subr.mxu0 0.0
    %435 = vmatpush1.msra.mxu0 0.0
    %436 = vmatprep.subr.mxu0 0.0
    %437 = vmatpush1.msra.mxu0 0.0
    %438 = vmatprep.subr.mxu0 0.0
    %439 = vmatpush1.msra.mxu0 0.0
    %440 = vmatprep.subr.mxu0 0.0
    %441 = vmatpush1.msra.mxu0 0.0
    %442 = vmatprep.subr.mxu0 0.0
    %443 = vmatpush1.msra.mxu0 0.0
    %444 = vmatprep.subr.mxu0 0.0
    %445 = vmatpush1.msra.mxu0 0.0
    %446 = vmatprep.subr.mxu0 0.0
    %447 = vmatpush1.msra.mxu0 0.0
    %448 = vmatprep.subr.mxu0 0.0
    %449 = vmatpush1.msra.mxu0 0.0
    %450 = vmatprep.subr.mxu0 0.0
    %451 = vmatpush1.msra.mxu0 0.0
    %452 = vmatprep.subr.mxu0 0.0
    %453 = vmatpush1.msra.mxu0 0.0
    %454 = vmatprep.subr.mxu0 0.0
    %455 = vmatpush1.msra.mxu0 0.0
    %456 = vmatprep.subr.mxu0 0.0
    %457 = vmatpush1.msra.mxu0 0.0
    %458 = vmatprep.subr.mxu0 0.0
    %459 = vmatpush1.msra.mxu0 0.0
    %460 = vmatprep.subr.mxu0 0.0
    %461 = vmatpush1.msra.mxu0 0.0
    %462 = vmatprep.subr.mxu0 0.0
    %463 = vmatpush1.msra.mxu0 0.0
    %464 = vmatprep.subr.mxu0 0.0
    %465 = vmatpush1.msra.mxu0 0.0
    %466 = vmatprep.subr.mxu0 0.0
    %467 = vmatpush1.msra.mxu0 0.0
    %468 = vmatprep.subr.mxu0 0.0
    %469 = vmatpush1.msra.mxu0 0.0
    %470 = vmatprep.subr.mxu0 0.0
    %471 = vmatpush1.msra.mxu0 0.0
    %472 = vmatprep.subr.mxu0 0.0
    %473 = vmatpush1.msra.mxu0 0.0
    %474 = vmatprep.subr.mxu0 0.0
    %475 = vmatpush1.msra.mxu0 0.0
    %476 = vmatprep.subr.mxu0 0.0
    %477 = vmatpush1.msra.mxu0 0.0
    %478 = vmatprep.subr.mxu0 0.0
    %479 = vmatpush1.msra.mxu0 0.0
    %480 = vmatprep.mubr.f32.mxu0 0.0
    %v481 = vand.u32 %v108, 4294901760
    %482 = vmatmul.mubr.f32.gmra.mrb[0].mxu0 %v481
    %v483 = vpop.f32.mrb[0].mxu0
    %v484 = vadd.f32 %v233, %v483
    %v485 = vpop.f32.mrb[0].mxu0
    %486 = vmatprep.mubr.f32.mxu0 0.0
    %v487 = vand.u32 %v111, 4294901760
    %488 = vmatmul.mubr.f32.gmra.mrb[0].mxu0 %v487
    %v489 = vpop.f32.mrb[0].mxu0
    %v490 = vadd.f32 %v243, %v489
    %v491 = vpop.f32.mrb[0].mxu0
    %492 = vmatprep.mubr.f32.mxu0 0.0
    %v493 = vand.u32 %v114, 4294901760
    %494 = vmatmul.mubr.f32.gmra.mrb[0].mxu0 %v493
    %v495 = vpop.f32.mrb[0].mxu0
    %v496 = vadd.f32 %v253, %v495
    %v497 = vpop.f32.mrb[0].mxu0
    %498 = vmatprep.mubr.f32.mxu0 0.0
    %v499 = vand.u32 %v117, 4294901760
    %500 = vmatmul.mubr.f32.gmra.mrb[0].mxu0 %v499
    %v501 = vpop.f32.mrb[0].mxu0
    %v502 = vadd.f32 %v263, %v501
    %v503 = vpop.f32.mrb[0].mxu0
    %504 = vmatprep.mubr.f32.mxu0 0.0
    %v505 = vand.u32 %v120, 4294901760
    %506 = vmatmul.mubr.f32.gmra.mrb[0].mxu0 %v505
    %v507 = vpop.f32.mrb[0].mxu0
    %v508 = vadd.f32 %v273, %v507
    %v509 = vpop.f32.mrb[0].mxu0
    %510 = vmatprep.mubr.f32.mxu0 0.0
    %v511 = vand.u32 %v123, 4294901760
    %512 = vmatmul.mubr.f32.gmra.mrb[0].mxu0 %v511
    %v513 = vpop.f32.mrb[0].mxu0
    %v514 = vadd.f32 %v283, %v513
    %v515 = vpop.f32.mrb[0].mxu0
    %516 = vmatprep.mubr.f32.mxu0 0.0
    %v517 = vand.u32 %v126, 4294901760
    %518 = vmatmul.mubr.f32.gmra.mrb[0].mxu0 %v517
    %v519 = vpop.f32.mrb[0].mxu0
    %v520 = vadd.f32 %v293, %v519
    %v521 = vpop.f32.mrb[0].mxu0
    %522 = vmatprep.mubr.f32.mxu0 0.0
    %v523 = vand.u32 %v129, 4294901760
    %524 = vmatmul.mubr.f32.gmra.mrb[0].mxu0 %v523
    %v525 = vpop.f32.mrb[0].mxu0
    %v526 = vadd.f32 %v303, %v525
    %v527 = vpop.f32.mrb[0].mxu0
    %528 = vmatprep.mubr.f32.mxu0 0.0
    %v529 = vand.u32 %v132, 4294901760
    %530 = vmatmul.mubr.f32.gmra.mrb[0].mxu0 %v529
    %v531 = vpop.f32.mrb[0].mxu0
    %v532 = vadd.f32 %v313, %v531
    %v533 = vpop.f32.mrb[0].mxu0
    %534 = vmatprep.mubr.f32.mxu0 0.0
    %v535 = vand.u32 %v135, 4294901760
    %536 = vmatmul.mubr.f32.gmra.mrb[0].mxu0 %v535
    %v537 = vpop.f32.mrb[0].mxu0
    %v538 = vadd.f32 %v323, %v537
    %v539 = vpop.f32.mrb[0].mxu0
    %540 = vmatprep.mubr.f32.mxu0 0.0
    %v541 = vand.u32 %v138, 4294901760
    %542 = vmatmul.mubr.f32.gmra.mrb[0].mxu0 %v541
    %v543 = vpop.f32.mrb[0].mxu0
    %v544 = vadd.f32 %v333, %v543
    %v545 = vpop.f32.mrb[0].mxu0
    %546 = vmatprep.mubr.f32.mxu0 0.0
    %v547 = vand.u32 %v141, 4294901760
    %548 = vmatmul.mubr.f32.gmra.mrb[0].mxu0 %v547
    %v549 = vpop.f32.mrb[0].mxu0
    %v550 = vadd.f32 %v343, %v549
    %v551 = vpop.f32.mrb[0].mxu0
    %552 = vmatprep.mubr.f32.mxu0 0.0
    %v553 = vand.u32 %v144, 4294901760
    %554 = vmatmul.mubr.f32.gmra.mrb[0].mxu0 %v553
    %v555 = vpop.f32.mrb[0].mxu0
    %v556 = vadd.f32 %v353, %v555
    %v557 = vpop.f32.mrb[0].mxu0
    %558 = vmatprep.mubr.f32.mxu0 0.0
    %v559 = vand.u32 %v147, 4294901760
    %560 = vmatmul.mubr.f32.gmra.mrb[0].mxu0 %v559
    %v561 = vpop.f32.mrb[0].mxu0
    %v562 = vadd.f32 %v363, %v561
    %v563 = vpop.f32.mrb[0].mxu0
    %564 = vmatprep.mubr.f32.mxu0 0.0
    %v565 = vand.u32 %v150, 4294901760
    %566 = vmatmul.mubr.f32.gmra.mrb[0].mxu0 %v565
    %v567 = vpop.f32.mrb[0].mxu0
    %v568 = vadd.f32 %v373, %v567
    %v569 = vpop.f32.mrb[0].mxu0
    %570 = vmatprep.mubr.f32.mxu0 0.0
    %v571 = vand.u32 %v153, 4294901760
    %572 = vmatmul.mubr.f32.gmra.mrb[0].mxu0 %v571
    %v573 = vpop.f32.mrb[0].mxu0
    %v574 = vadd.f32 %v383, %v573
    %v575 = vpop.f32.mrb[0].mxu0
    %576 = vdwg.mxu0
    %577 = vmatprep.subr.mxu0 0.0
    %v578 = vand.u32 %v100, 4294901760
    %v579 = vsub.f32 %v100, %v578
    %580 = vmatpush1.msra.mxu0 %v579
    %581 = vmatprep.subr.mxu0 0.0
    %v582 = vand.u32 %v101, 4294901760
    %v583 = vsub.f32 %v101, %v582
    %584 = vmatpush1.msra.mxu0 %v583
    %585 = vmatprep.subr.mxu0 0.0
    %v586 = vand.u32 %v102, 4294901760
    %v587 = vsub.f32 %v102, %v586
    %588 = vmatpush1.msra.mxu0 %v587
    %589 = vmatprep.subr.mxu0 0.0
    %v590 = vand.u32 %v103, 4294901760
    %v591 = vsub.f32 %v103, %v590
    %592 = vmatpush1.msra.mxu0 %v591
    %593 = vmatprep.subr.mxu0 0.0
    %v594 = vand.u32 %v104, 4294901760
    %v595 = vsub.f32 %v104, %v594
    %596 = vmatpush1.msra.mxu0 %v595
    %597 = vmatprep.subr.mxu0 0.0
    %v598 = vand.u32 %v105, 4294901760
    %v599 = vsub.f32 %v105, %v598
    %600 = vmatpush1.msra.mxu0 %v599
    %601 = vmatprep.subr.mxu0 0.0
    %602 = vmatpush1.msra.mxu0 0.0
    %603 = vmatprep.subr.mxu0 0.0
    %604 = vmatpush1.msra.mxu0 0.0
    %605 = vmatprep.subr.mxu0 0.0
    %606 = vmatpush1.msra.mxu0 0.0
    %607 = vmatprep.subr.mxu0 0.0
    %608 = vmatpush1.msra.mxu0 0.0
    %609 = vmatprep.subr.mxu0 0.0
    %610 = vmatpush1.msra.mxu0 0.0
    %611 = vmatprep.subr.mxu0 0.0
    %612 = vmatpush1.msra.mxu0 0.0
    %613 = vmatprep.subr.mxu0 0.0
    %614 = vmatpush1.msra.mxu0 0.0
    %615 = vmatprep.subr.mxu0 0.0
    %616 = vmatpush1.msra.mxu0 0.0
    %617 = vmatprep.subr.mxu0 0.0
    %618 = vmatpush1.msra.mxu0 0.0
    %619 = vmatprep.subr.mxu0 0.0
    %620 = vmatpush1.msra.mxu0 0.0
    %621 = vmatprep.subr.mxu0 0.0
    %622 = vmatpush1.msra.mxu0 0.0
    %623 = vmatprep.subr.mxu0 0.0
    %624 = vmatpush1.msra.mxu0 0.0
    %625 = vmatprep.subr.mxu0 0.0
    %626 = vmatpush1.msra.mxu0 0.0
    %627 = vmatprep.subr.mxu0 0.0
    %628 = vmatpush1.msra.mxu0 0.0
    %629 = vmatprep.subr.mxu0 0.0
    %630 = vmatpush1.msra.mxu0 0.0
    %631 = vmatprep.subr.mxu0 0.0
    %632 = vmatpush1.msra.mxu0 0.0
    %633 = vmatprep.subr.mxu0 0.0
    %634 = vmatpush1.msra.mxu0 0.0
    %635 = vmatprep.subr.mxu0 0.0
    %636 = vmatpush1.msra.mxu0 0.0
    %637 = vmatprep.subr.mxu0 0.0
    %638 = vmatpush1.msra.mxu0 0.0
    %639 = vmatprep.subr.mxu0 0.0
    %640 = vmatpush1.msra.mxu0 0.0
    %641 = vmatprep.subr.mxu0 0.0
    %642 = vmatpush1.msra.mxu0 0.0
    %643 = vmatprep.subr.mxu0 0.0
    %644 = vmatpush1.msra.mxu0 0.0
    %645 = vmatprep.subr.mxu0 0.0
    %646 = vmatpush1.msra.mxu0 0.0
    %647 = vmatprep.subr.mxu0 0.0
    %648 = vmatpush1.msra.mxu0 0.0
    %649 = vmatprep.subr.mxu0 0.0
    %650 = vmatpush1.msra.mxu0 0.0
    %651 = vmatprep.subr.mxu0 0.0
    %652 = vmatpush1.msra.mxu0 0.0
    %653 = vmatprep.mubr.f32.mxu0 0.0
    %v654 = vand.u32 %v108, 4294901760
    %v655 = vsub.f32 %v108, %v654
    %656 = vmatmul.mubr.f32.gmra.mrb[0].mxu0 %v655
    %v657 = vpop.f32.mrb[0].mxu0
    %v658 = vadd.f32 %v484, %v657
    %v659 = vpop.f32.mrb[0].mxu0
    %660 = vmatprep.mubr.f32.mxu0 0.0
    %v661 = vand.u32 %v111, 4294901760
    %v662 = vsub.f32 %v111, %v661
    %663 = vmatmul.mubr.f32.gmra.mrb[0].mxu0 %v662
    %v664 = vpop.f32.mrb[0].mxu0
    %v665 = vadd.f32 %v490, %v664
    %v666 = vpop.f32.mrb[0].mxu0
    %667 = vmatprep.mubr.f32.mxu0 0.0
    %v668 = vand.u32 %v114, 4294901760
    %v669 = vsub.f32 %v114, %v668
    %670 = vmatmul.mubr.f32.gmra.mrb[0].mxu0 %v669
    %v671 = vpop.f32.mrb[0].mxu0
    %v672 = vadd.f32 %v496, %v671
    %v673 = vpop.f32.mrb[0].mxu0
    %674 = vmatprep.mubr.f32.mxu0 0.0
    %v675 = vand.u32 %v117, 4294901760
    %v676 = vsub.f32 %v117, %v675
    %677 = vmatmul.mubr.f32.gmra.mrb[0].mxu0 %v676
    %v678 = vpop.f32.mrb[0].mxu0
    %v679 = vadd.f32 %v502, %v678
    %v680 = vpop.f32.mrb[0].mxu0
    %681 = vmatprep.mubr.f32.mxu0 0.0
    %v682 = vand.u32 %v120, 4294901760
    %v683 = vsub.f32 %v120, %v682
    %684 = vmatmul.mubr.f32.gmra.mrb[0].mxu0 %v683
    %v685 = vpop.f32.mrb[0].mxu0
    %v686 = vadd.f32 %v508, %v685
    %v687 = vpop.f32.mrb[0].mxu0
    %688 = vmatprep.mubr.f32.mxu0 0.0
    %v689 = vand.u32 %v123, 4294901760
    %v690 = vsub.f32 %v123, %v689
    %691 = vmatmul.mubr.f32.gmra.mrb[0].mxu0 %v690
    %v692 = vpop.f32.mrb[0].mxu0
    %v693 = vadd.f32 %v514, %v692
    %v694 = vpop.f32.mrb[0].mxu0
    %695 = vmatprep.mubr.f32.mxu0 0.0
    %v696 = vand.u32 %v126, 4294901760
    %v697 = vsub.f32 %v126, %v696
    %698 = vmatmul.mubr.f32.gmra.mrb[0].mxu0 %v697
    %v699 = vpop.f32.mrb[0].mxu0
    %v700 = vadd.f32 %v520, %v699
    %v701 = vpop.f32.mrb[0].mxu0
    %702 = vmatprep.mubr.f32.mxu0 0.0
    %v703 = vand.u32 %v129, 4294901760
    %v704 = vsub.f32 %v129, %v703
    %705 = vmatmul.mubr.f32.gmra.mrb[0].mxu0 %v704
    %v706 = vpop.f32.mrb[0].mxu0
    %v707 = vadd.f32 %v526, %v706
    %v708 = vpop.f32.mrb[0].mxu0
    %709 = vmatprep.mubr.f32.mxu0 0.0
    %v710 = vand.u32 %v132, 4294901760
    %v711 = vsub.f32 %v132, %v710
    %712 = vmatmul.mubr.f32.gmra.mrb[0].mxu0 %v711
    %v713 = vpop.f32.mrb[0].mxu0
    %v714 = vadd.f32 %v532, %v713
    %v715 = vpop.f32.mrb[0].mxu0
    %716 = vmatprep.mubr.f32.mxu0 0.0
    %v717 = vand.u32 %v135, 4294901760
    %v718 = vsub.f32 %v135, %v717
    %719 = vmatmul.mubr.f32.gmra.mrb[0].mxu0 %v718
    %v720 = vpop.f32.mrb[0].mxu0
    %v721 = vadd.f32 %v538, %v720
    %v722 = vpop.f32.mrb[0].mxu0
    %723 = vmatprep.mubr.f32.mxu0 0.0
    %v724 = vand.u32 %v138, 4294901760
    %v725 = vsub.f32 %v138, %v724
    %726 = vmatmul.mubr.f32.gmra.mrb[0].mxu0 %v725
    %v727 = vpop.f32.mrb[0].mxu0
    %v728 = vadd.f32 %v544, %v727
    %v729 = vpop.f32.mrb[0].mxu0
    %730 = vmatprep.mubr.f32.mxu0 0.0
    %v731 = vand.u32 %v141, 4294901760
    %v732 = vsub.f32 %v141, %v731
    %733 = vmatmul.mubr.f32.gmra.mrb[0].mxu0 %v732
    %v734 = vpop.f32.mrb[0].mxu0
    %v735 = vadd.f32 %v550, %v734
    %v736 = vpop.f32.mrb[0].mxu0
    %737 = vmatprep.mubr.f32.mxu0 0.0
    %v738 = vand.u32 %v144, 4294901760
    %v739 = vsub.f32 %v144, %v738
    %740 = vmatmul.mubr.f32.gmra.mrb[0].mxu0 %v739
    %v741 = vpop.f32.mrb[0].mxu0
    %v742 = vadd.f32 %v556, %v741
    %v743 = vpop.f32.mrb[0].mxu0
    %744 = vmatprep.mubr.f32.mxu0 0.0
    %v745 = vand.u32 %v147, 4294901760
    %v746 = vsub.f32 %v147, %v745
    %747 = vmatmul.mubr.f32.gmra.mrb[0].mxu0 %v746
    %v748 = vpop.f32.mrb[0].mxu0
    %v749 = vadd.f32 %v562, %v748
    %v750 = vpop.f32.mrb[0].mxu0
    %751 = vmatprep.mubr.f32.mxu0 0.0
    %v752 = vand.u32 %v150, 4294901760
    %v753 = vsub.f32 %v150, %v752
    %754 = vmatmul.mubr.f32.gmra.mrb[0].mxu0 %v753
    %v755 = vpop.f32.mrb[0].mxu0
    %v756 = vadd.f32 %v568, %v755
    %v757 = vpop.f32.mrb[0].mxu0
    %758 = vmatprep.mubr.f32.mxu0 0.0
    %v759 = vand.u32 %v153, 4294901760
    %v760 = vsub.f32 %v153, %v759
    %761 = vmatmul.mubr.f32.gmra.mrb[0].mxu0 %v760
    %v762 = vpop.f32.mrb[0].mxu0
    %v763 = vadd.f32 %v574, %v762
    %v764 = vpop.f32.mrb[0].mxu0
    %765 = vdwg.mxu0
    %766 = vmatprep.subr.mxu0 0.0
    %v767 = vand.u32 %v100, 4294901760
    %768 = vmatpush1.msra.mxu0 %v767
    %769 = vmatprep.subr.mxu0 0.0
    %v770 = vand.u32 %v101, 4294901760
    %771 = vmatpush1.msra.mxu0 %v770
    %772 = vmatprep.subr.mxu0 0.0
    %v773 = vand.u32 %v102, 4294901760
    %774 = vmatpush1.msra.mxu0 %v773
    %775 = vmatprep.subr.mxu0 0.0
    %v776 = vand.u32 %v103, 4294901760
    %777 = vmatpush1.msra.mxu0 %v776
    %778 = vmatprep.subr.mxu0 0.0
    %v779 = vand.u32 %v104, 4294901760
    %780 = vmatpush1.msra.mxu0 %v779
    %781 = vmatprep.subr.mxu0 0.0
    %v782 = vand.u32 %v105, 4294901760
    %783 = vmatpush1.msra.mxu0 %v782
    %784 = vmatprep.subr.mxu0 0.0
    %785 = vmatpush1.msra.mxu0 0.0
    %786 = vmatprep.subr.mxu0 0.0
    %787 = vmatpush1.msra.mxu0 0.0
    %788 = vmatprep.subr.mxu0 0.0
    %789 = vmatpush1.msra.mxu0 0.0
    %790 = vmatprep.subr.mxu0 0.0
    %791 = vmatpush1.msra.mxu0 0.0
    %792 = vmatprep.subr.mxu0 0.0
    %793 = vmatpush1.msra.mxu0 0.0
    %794 = vmatprep.subr.mxu0 0.0
    %795 = vmatpush1.msra.mxu0 0.0
    %796 = vmatprep.subr.mxu0 0.0
    %797 = vmatpush1.msra.mxu0 0.0
    %798 = vmatprep.subr.mxu0 0.0
    %799 = vmatpush1.msra.mxu0 0.0
    %800 = vmatprep.subr.mxu0 0.0
    %801 = vmatpush1.msra.mxu0 0.0
    %802 = vmatprep.subr.mxu0 0.0
    %803 = vmatpush1.msra.mxu0 0.0
    %804 = vmatprep.subr.mxu0 0.0
    %805 = vmatpush1.msra.mxu0 0.0
    %806 = vmatprep.subr.mxu0 0.0
    %807 = vmatpush1.msra.mxu0 0.0
    %808 = vmatprep.subr.mxu0 0.0
    %809 = vmatpush1.msra.mxu0 0.0
    %810 = vmatprep.subr.mxu0 0.0
    %811 = vmatpush1.msra.mxu0 0.0
    %812 = vmatprep.subr.mxu0 0.0
    %813 = vmatpush1.msra.mxu0 0.0
    %814 = vmatprep.subr.mxu0 0.0
    %815 = vmatpush1.msra.mxu0 0.0
    %816 = vmatprep.subr.mxu0 0.0
    %817 = vmatpush1.msra.mxu0 0.0
    %818 = vmatprep.subr.mxu0 0.0
    %819 = vmatpush1.msra.mxu0 0.0
    %820 = vmatprep.subr.mxu0 0.0
    %821 = vmatpush1.msra.mxu0 0.0
    %822 = vmatprep.subr.mxu0 0.0
    %823 = vmatpush1.msra.mxu0 0.0
    %824 = vmatprep.subr.mxu0 0.0
    %825 = vmatpush1.msra.mxu0 0.0
    %826 = vmatprep.subr.mxu0 0.0
    %827 = vmatpush1.msra.mxu0 0.0
    %828 = vmatprep.subr.mxu0 0.0
    %829 = vmatpush1.msra.mxu0 0.0
    %830 = vmatprep.subr.mxu0 0.0
    %831 = vmatpush1.msra.mxu0 0.0
    %832 = vmatprep.subr.mxu0 0.0
    %833 = vmatpush1.msra.mxu0 0.0
    %834 = vmatprep.subr.mxu0 0.0
    %835 = vmatpush1.msra.mxu0 0.0
    %836 = vmatprep.mubr.f32.mxu0 0.0
    %v837 = vand.u32 %v108, 4294901760
    %v838 = vsub.f32 %v108, %v837
    %v839 = vand.u32 %v838, 4294901760
    %840 = vmatmul.mubr.f32.gmra.mrb[0].mxu0 %v839
    %v841 = vpop.f32.mrb[0].mxu0
    %v842 = vadd.f32 %v658, %v841
    %v843 = vpop.f32.mrb[0].mxu0
    %844 = vmatprep.mubr.f32.mxu0 0.0
    %v845 = vand.u32 %v111, 4294901760
    %v846 = vsub.f32 %v111, %v845
    %v847 = vand.u32 %v846, 4294901760
    %848 = vmatmul.mubr.f32.gmra.mrb[0].mxu0 %v847
    %v849 = vpop.f32.mrb[0].mxu0
    %v850 = vadd.f32 %v665, %v849
    %v851 = vpop.f32.mrb[0].mxu0
    %852 = vmatprep.mubr.f32.mxu0 0.0
    %v853 = vand.u32 %v114, 4294901760
    %v854 = vsub.f32 %v114, %v853
    %v855 = vand.u32 %v854, 4294901760
    %856 = vmatmul.mubr.f32.gmra.mrb[0].mxu0 %v855
    %v857 = vpop.f32.mrb[0].mxu0
    %v858 = vadd.f32 %v672, %v857
    %v859 = vpop.f32.mrb[0].mxu0
    %860 = vmatprep.mubr.f32.mxu0 0.0
    %v861 = vand.u32 %v117, 4294901760
    %v862 = vsub.f32 %v117, %v861
    %v863 = vand.u32 %v862, 4294901760
    %864 = vmatmul.mubr.f32.gmra.mrb[0].mxu0 %v863
    %v865 = vpop.f32.mrb[0].mxu0
    %v866 = vadd.f32 %v679, %v865
    %v867 = vpop.f32.mrb[0].mxu0
    %868 = vmatprep.mubr.f32.mxu0 0.0
    %v869 = vand.u32 %v120, 4294901760
    %v870 = vsub.f32 %v120, %v869
    %v871 = vand.u32 %v870, 4294901760
    %872 = vmatmul.mubr.f32.gmra.mrb[0].mxu0 %v871
    %v873 = vpop.f32.mrb[0].mxu0
    %v874 = vadd.f32 %v686, %v873
    %v875 = vpop.f32.mrb[0].mxu0
    %876 = vmatprep.mubr.f32.mxu0 0.0
    %v877 = vand.u32 %v123, 4294901760
    %v878 = vsub.f32 %v123, %v877
    %v879 = vand.u32 %v878, 4294901760
    %880 = vmatmul.mubr.f32.gmra.mrb[0].mxu0 %v879
    %v881 = vpop.f32.mrb[0].mxu0
    %v882 = vadd.f32 %v693, %v881
    %v883 = vpop.f32.mrb[0].mxu0
    %884 = vmatprep.mubr.f32.mxu0 0.0
    %v885 = vand.u32 %v126, 4294901760
    %v886 = vsub.f32 %v126, %v885
    %v887 = vand.u32 %v886, 4294901760
    %888 = vmatmul.mubr.f32.gmra.mrb[0].mxu0 %v887
    %v889 = vpop.f32.mrb[0].mxu0
    %v890 = vadd.f32 %v700, %v889
    %v891 = vpop.f32.mrb[0].mxu0
    %892 = vmatprep.mubr.f32.mxu0 0.0
    %v893 = vand.u32 %v129, 4294901760
    %v894 = vsub.f32 %v129, %v893
    %v895 = vand.u32 %v894, 4294901760
    %896 = vmatmul.mubr.f32.gmra.mrb[0].mxu0 %v895
    %v897 = vpop.f32.mrb[0].mxu0
    %v898 = vadd.f32 %v707, %v897
    %v899 = vpop.f32.mrb[0].mxu0
    %900 = vmatprep.mubr.f32.mxu0 0.0
    %v901 = vand.u32 %v132, 4294901760
    %v902 = vsub.f32 %v132, %v901
    %v903 = vand.u32 %v902, 4294901760
    %904 = vmatmul.mubr.f32.gmra.mrb[0].mxu0 %v903
    %v905 = vpop.f32.mrb[0].mxu0
    %v906 = vadd.f32 %v714, %v905
    %v907 = vpop.f32.mrb[0].mxu0
    %908 = vmatprep.mubr.f32.mxu0 0.0
    %v909 = vand.u32 %v135, 4294901760
    %v910 = vsub.f32 %v135, %v909
    %v911 = vand.u32 %v910, 4294901760
    %912 = vmatmul.mubr.f32.gmra.mrb[0].mxu0 %v911
    %v913 = vpop.f32.mrb[0].mxu0
    %v914 = vadd.f32 %v721, %v913
    %v915 = vpop.f32.mrb[0].mxu0
    %916 = vmatprep.mubr.f32.mxu0 0.0
    %v917 = vand.u32 %v138, 4294901760
    %v918 = vsub.f32 %v138, %v917
    %v919 = vand.u32 %v918, 4294901760
    %920 = vmatmul.mubr.f32.gmra.mrb[0].mxu0 %v919
    %v921 = vpop.f32.mrb[0].mxu0
    %v922 = vadd.f32 %v728, %v921
    %v923 = vpop.f32.mrb[0].mxu0
    %924 = vmatprep.mubr.f32.mxu0 0.0
    %v925 = vand.u32 %v141, 4294901760
    %v926 = vsub.f32 %v141, %v925
    %v927 = vand.u32 %v926, 4294901760
    %928 = vmatmul.mubr.f32.gmra.mrb[0].mxu0 %v927
    %v929 = vpop.f32.mrb[0].mxu0
    %v930 = vadd.f32 %v735, %v929
    %v931 = vpop.f32.mrb[0].mxu0
    %932 = vmatprep.mubr.f32.mxu0 0.0
    %v933 = vand.u32 %v144, 4294901760
    %v934 = vsub.f32 %v144, %v933
    %v935 = vand.u32 %v934, 4294901760
    %936 = vmatmul.mubr.f32.gmra.mrb[0].mxu0 %v935
    %v937 = vpop.f32.mrb[0].mxu0
    %v938 = vadd.f32 %v742, %v937
    %v939 = vpop.f32.mrb[0].mxu0
    %940 = vmatprep.mubr.f32.mxu0 0.0
    %v941 = vand.u32 %v147, 4294901760
    %v942 = vsub.f32 %v147, %v941
    %v943 = vand.u32 %v942, 4294901760
    %944 = vmatmul.mubr.f32.gmra.mrb[0].mxu0 %v943
    %v945 = vpop.f32.mrb[0].mxu0
    %v946 = vadd.f32 %v749, %v945
    %v947 = vpop.f32.mrb[0].mxu0
    %948 = vmatprep.mubr.f32.mxu0 0.0
    %v949 = vand.u32 %v150, 4294901760
    %v950 = vsub.f32 %v150, %v949
    %v951 = vand.u32 %v950, 4294901760
    %952 = vmatmul.mubr.f32.gmra.mrb[0].mxu0 %v951
    %v953 = vpop.f32.mrb[0].mxu0
    %v954 = vadd.f32 %v756, %v953
    %v955 = vpop.f32.mrb[0].mxu0
    %956 = vmatprep.mubr.f32.mxu0 0.0
    %v957 = vand.u32 %v153, 4294901760
    %v958 = vsub.f32 %v153, %v957
    %v959 = vand.u32 %v958, 4294901760
    %960 = vmatmul.mubr.f32.gmra.mrb[0].mxu0 %v959
    %v961 = vpop.f32.mrb[0].mxu0
    %v962 = vadd.f32 %v763, %v961
    %v963 = vpop.f32.mrb[0].mxu0
    %964 = vdwg.mxu0
    %965 = vmatprep.subr.mxu0 0.0
    %v966 = vand.u32 %v100, 4294901760
    %v967 = vsub.f32 %v100, %v966
    %v968 = vand.u32 %v967, 4294901760
    %969 = vmatpush1.msra.mxu0 %v968
    %970 = vmatprep.subr.mxu0 0.0
    %v971 = vand.u32 %v101, 4294901760
    %v972 = vsub.f32 %v101, %v971
    %v973 = vand.u32 %v972, 4294901760
    %974 = vmatpush1.msra.mxu0 %v973
    %975 = vmatprep.subr.mxu0 0.0
    %v976 = vand.u32 %v102, 4294901760
    %v977 = vsub.f32 %v102, %v976
    %v978 = vand.u32 %v977, 4294901760
    %979 = vmatpush1.msra.mxu0 %v978
    %980 = vmatprep.subr.mxu0 0.0
    %v981 = vand.u32 %v103, 4294901760
    %v982 = vsub.f32 %v103, %v981
    %v983 = vand.u32 %v982, 4294901760
    %984 = vmatpush1.msra.mxu0 %v983
    %985 = vmatprep.subr.mxu0 0.0
    %v986 = vand.u32 %v104, 4294901760
    %v987 = vsub.f32 %v104, %v986
    %v988 = vand.u32 %v987, 4294901760
    %989 = vmatpush1.msra.mxu0 %v988
    %990 = vmatprep.subr.mxu0 0.0
    %v991 = vand.u32 %v105, 4294901760
    %v992 = vsub.f32 %v105, %v991
    %v993 = vand.u32 %v992, 4294901760
    %994 = vmatpush1.msra.mxu0 %v993
    %995 = vmatprep.subr.mxu0 0.0
    %996 = vmatpush1.msra.mxu0 0.0
    %997 = vmatprep.subr.mxu0 0.0
    %998 = vmatpush1.msra.mxu0 0.0
    %999 = vmatprep.subr.mxu0 0.0
    %1000 = vmatpush1.msra.mxu0 0.0
    %1001 = vmatprep.subr.mxu0 0.0
    %1002 = vmatpush1.msra.mxu0 0.0
    %1003 = vmatprep.subr.mxu0 0.0
    %1004 = vmatpush1.msra.mxu0 0.0
    %1005 = vmatprep.subr.mxu0 0.0
    %1006 = vmatpush1.msra.mxu0 0.0
    %1007 = vmatprep.subr.mxu0 0.0
    %1008 = vmatpush1.msra.mxu0 0.0
    %1009 = vmatprep.subr.mxu0 0.0
    %1010 = vmatpush1.msra.mxu0 0.0
    %1011 = vmatprep.subr.mxu0 0.0
    %1012 = vmatpush1.msra.mxu0 0.0
    %1013 = vmatprep.subr.mxu0 0.0
    %1014 = vmatpush1.msra.mxu0 0.0
    %1015 = vmatprep.subr.mxu0 0.0
    %1016 = vmatpush1.msra.mxu0 0.0
    %1017 = vmatprep.subr.mxu0 0.0
    %1018 = vmatpush1.msra.mxu0 0.0
    %1019 = vmatprep.subr.mxu0 0.0
    %1020 = vmatpush1.msra.mxu0 0.0
    %1021 = vmatprep.subr.mxu0 0.0
    %1022 = vmatpush1.msra.mxu0 0.0
    %1023 = vmatprep.subr.mxu0 0.0
    %1024 = vmatpush1.msra.mxu0 0.0
    %1025 = vmatprep.subr.mxu0 0.0
    %1026 = vmatpush1.msra.mxu0 0.0
    %1027 = vmatprep.subr.mxu0 0.0
    %1028 = vmatpush1.msra.mxu0 0.0
    %1029 = vmatprep.subr.mxu0 0.0
    %1030 = vmatpush1.msra.mxu0 0.0
    %1031 = vmatprep.subr.mxu0 0.0
    %1032 = vmatpush1.msra.mxu0 0.0
    %1033 = vmatprep.subr.mxu0 0.0
    %1034 = vmatpush1.msra.mxu0 0.0
    %1035 = vmatprep.subr.mxu0 0.0
    %1036 = vmatpush1.msra.mxu0 0.0
    %1037 = vmatprep.subr.mxu0 0.0
    %1038 = vmatpush1.msra.mxu0 0.0
    %1039 = vmatprep.subr.mxu0 0.0
    %1040 = vmatpush1.msra.mxu0 0.0
    %1041 = vmatprep.subr.mxu0 0.0
    %1042 = vmatpush1.msra.mxu0 0.0
    %1043 = vmatprep.subr.mxu0 0.0
    %1044 = vmatpush1.msra.mxu0 0.0
    %1045 = vmatprep.subr.mxu0 0.0
    %1046 = vmatpush1.msra.mxu0 0.0
    %1047 = vmatprep.mubr.f32.mxu0 0.0
    %v1048 = vand.u32 %v108, 4294901760
    %1049 = vmatmul.mubr.f32.gmra.mrb[0].mxu0 %v1048
    %v1050 = vpop.f32.mrb[0].mxu0
    %v1051 = vadd.f32 %v842, %v1050
    %v1052 = vpop.f32.mrb[0].mxu0
    %1053 = vmatprep.mubr.f32.mxu0 0.0
    %v1054 = vand.u32 %v111, 4294901760
    %1055 = vmatmul.mubr.f32.gmra.mrb[0].mxu0 %v1054
    %v1056 = vpop.f32.mrb[0].mxu0
    %v1057 = vadd.f32 %v850, %v1056
    %v1058 = vpop.f32.mrb[0].mxu0
    %1059 = vmatprep.mubr.f32.mxu0 0.0
    %v1060 = vand.u32 %v114, 4294901760
    %1061 = vmatmul.mubr.f32.gmra.mrb[0].mxu0 %v1060
    %v1062 = vpop.f32.mrb[0].mxu0
    %v1063 = vadd.f32 %v858, %v1062
    %v1064 = vpop.f32.mrb[0].mxu0
    %1065 = vmatprep.mubr.f32.mxu0 0.0
    %v1066 = vand.u32 %v117, 4294901760
    %1067 = vmatmul.mubr.f32.gmra.mrb[0].mxu0 %v1066
    %v1068 = vpop.f32.mrb[0].mxu0
    %v1069 = vadd.f32 %v866, %v1068
    %v1070 = vpop.f32.mrb[0].mxu0
    %1071 = vmatprep.mubr.f32.mxu0 0.0
    %v1072 = vand.u32 %v120, 4294901760
    %1073 = vmatmul.mubr.f32.gmra.mrb[0].mxu0 %v1072
    %v1074 = vpop.f32.mrb[0].mxu0
    %v1075 = vadd.f32 %v874, %v1074
    %v1076 = vpop.f32.mrb[0].mxu0
    %1077 = vmatprep.mubr.f32.mxu0 0.0
    %v1078 = vand.u32 %v123, 4294901760
    %1079 = vmatmul.mubr.f32.gmra.mrb[0].mxu0 %v1078
    %v1080 = vpop.f32.mrb[0].mxu0
    %v1081 = vadd.f32 %v882, %v1080
    %v1082 = vpop.f32.mrb[0].mxu0
    %1083 = vmatprep.mubr.f32.mxu0 0.0
    %v1084 = vand.u32 %v126, 4294901760
    %1085 = vmatmul.mubr.f32.gmra.mrb[0].mxu0 %v1084
    %v1086 = vpop.f32.mrb[0].mxu0
    %v1087 = vadd.f32 %v890, %v1086
    %v1088 = vpop.f32.mrb[0].mxu0
    %1089 = vmatprep.mubr.f32.mxu0 0.0
    %v1090 = vand.u32 %v129, 4294901760
    %1091 = vmatmul.mubr.f32.gmra.mrb[0].mxu0 %v1090
    %v1092 = vpop.f32.mrb[0].mxu0
    %v1093 = vadd.f32 %v898, %v1092
    %v1094 = vpop.f32.mrb[0].mxu0
    %1095 = vmatprep.mubr.f32.mxu0 0.0
    %v1096 = vand.u32 %v132, 4294901760
    %1097 = vmatmul.mubr.f32.gmra.mrb[0].mxu0 %v1096
    %v1098 = vpop.f32.mrb[0].mxu0
    %v1099 = vadd.f32 %v906, %v1098
    %v1100 = vpop.f32.mrb[0].mxu0
    %1101 = vmatprep.mubr.f32.mxu0 0.0
    %v1102 = vand.u32 %v135, 4294901760
    %1103 = vmatmul.mubr.f32.gmra.mrb[0].mxu0 %v1102
    %v1104 = vpop.f32.mrb[0].mxu0
    %v1105 = vadd.f32 %v914, %v1104
    %v1106 = vpop.f32.mrb[0].mxu0
    %1107 = vmatprep.mubr.f32.mxu0 0.0
    %v1108 = vand.u32 %v138, 4294901760
    %1109 = vmatmul.mubr.f32.gmra.mrb[0].mxu0 %v1108
    %v1110 = vpop.f32.mrb[0].mxu0
    %v1111 = vadd.f32 %v922, %v1110
    %v1112 = vpop.f32.mrb[0].mxu0
    %1113 = vmatprep.mubr.f32.mxu0 0.0
    %v1114 = vand.u32 %v141, 4294901760
    %1115 = vmatmul.mubr.f32.gmra.mrb[0].mxu0 %v1114
    %v1116 = vpop.f32.mrb[0].mxu0
    %v1117 = vadd.f32 %v930, %v1116
    %v1118 = vpop.f32.mrb[0].mxu0
    %1119 = vmatprep.mubr.f32.mxu0 0.0
    %v1120 = vand.u32 %v144, 4294901760
    %1121 = vmatmul.mubr.f32.gmra.mrb[0].mxu0 %v1120
    %v1122 = vpop.f32.mrb[0].mxu0
    %v1123 = vadd.f32 %v938, %v1122
    %v1124 = vpop.f32.mrb[0].mxu0
    %1125 = vmatprep.mubr.f32.mxu0 0.0
    %v1126 = vand.u32 %v147, 4294901760
    %1127 = vmatmul.mubr.f32.gmra.mrb[0].mxu0 %v1126
    %v1128 = vpop.f32.mrb[0].mxu0
    %v1129 = vadd.f32 %v946, %v1128
    %v1130 = vpop.f32.mrb[0].mxu0
    %1131 = vmatprep.mubr.f32.mxu0 0.0
    %v1132 = vand.u32 %v150, 4294901760
    %1133 = vmatmul.mubr.f32.gmra.mrb[0].mxu0 %v1132
    %v1134 = vpop.f32.mrb[0].mxu0
    %v1135 = vadd.f32 %v954, %v1134
    %v1136 = vpop.f32.mrb[0].mxu0
    %1137 = vmatprep.mubr.f32.mxu0 0.0
    %v1138 = vand.u32 %v153, 4294901760
    %1139 = vmatmul.mubr.f32.gmra.mrb[0].mxu0 %v1138
    %v1140 = vpop.f32.mrb[0].mxu0
    %v1141 = vadd.f32 %v962, %v1140
    %v1142 = vpop.f32.mrb[0].mxu0
    %1143 = vdwg.mxu0
    %1144 = vmatprep.subr.mxu0 0.0
    %v1145 = vand.u32 %v100, 4294901760
    %1146 = vmatpush1.msra.mxu0 %v1145
    %1147 = vmatprep.subr.mxu0 0.0
    %v1148 = vand.u32 %v101, 4294901760
    %1149 = vmatpush1.msra.mxu0 %v1148
    %1150 = vmatprep.subr.mxu0 0.0
    %v1151 = vand.u32 %v102, 4294901760
    %1152 = vmatpush1.msra.mxu0 %v1151
    %1153 = vmatprep.subr.mxu0 0.0
    %v1154 = vand.u32 %v103, 4294901760
    %1155 = vmatpush1.msra.mxu0 %v1154
    %1156 = vmatprep.subr.mxu0 0.0
    %v1157 = vand.u32 %v104, 4294901760
    %1158 = vmatpush1.msra.mxu0 %v1157
    %1159 = vmatprep.subr.mxu0 0.0
    %v1160 = vand.u32 %v105, 4294901760
    %1161 = vmatpush1.msra.mxu0 %v1160
    %1162 = vmatprep.subr.mxu0 0.0
    %1163 = vmatpush1.msra.mxu0 0.0
    %1164 = vmatprep.subr.mxu0 0.0
    %1165 = vmatpush1.msra.mxu0 0.0
    %1166 = vmatprep.subr.mxu0 0.0
    %1167 = vmatpush1.msra.mxu0 0.0
    %1168 = vmatprep.subr.mxu0 0.0
    %1169 = vmatpush1.msra.mxu0 0.0
    %1170 = vmatprep.subr.mxu0 0.0
    %1171 = vmatpush1.msra.mxu0 0.0
    %1172 = vmatprep.subr.mxu0 0.0
    %1173 = vmatpush1.msra.mxu0 0.0
    %1174 = vmatprep.subr.mxu0 0.0
    %1175 = vmatpush1.msra.mxu0 0.0
    %1176 = vmatprep.subr.mxu0 0.0
    %1177 = vmatpush1.msra.mxu0 0.0
    %1178 = vmatprep.subr.mxu0 0.0
    %1179 = vmatpush1.msra.mxu0 0.0
    %1180 = vmatprep.subr.mxu0 0.0
    %1181 = vmatpush1.msra.mxu0 0.0
    %1182 = vmatprep.subr.mxu0 0.0
    %1183 = vmatpush1.msra.mxu0 0.0
    %1184 = vmatprep.subr.mxu0 0.0
    %1185 = vmatpush1.msra.mxu0 0.0
    %1186 = vmatprep.subr.mxu0 0.0
    %1187 = vmatpush1.msra.mxu0 0.0
    %1188 = vmatprep.subr.mxu0 0.0
    %1189 = vmatpush1.msra.mxu0 0.0
    %1190 = vmatprep.subr.mxu0 0.0
    %1191 = vmatpush1.msra.mxu0 0.0
    %1192 = vmatprep.subr.mxu0 0.0
    %1193 = vmatpush1.msra.mxu0 0.0
    %1194 = vmatprep.subr.mxu0 0.0
    %1195 = vmatpush1.msra.mxu0 0.0
    %1196 = vmatprep.subr.mxu0 0.0
    %1197 = vmatpush1.msra.mxu0 0.0
    %1198 = vmatprep.subr.mxu0 0.0
    %1199 = vmatpush1.msra.mxu0 0.0
    %1200 = vmatprep.subr.mxu0 0.0
    %1201 = vmatpush1.msra.mxu0 0.0
    %1202 = vmatprep.subr.mxu0 0.0
    %1203 = vmatpush1.msra.mxu0 0.0
    %1204 = vmatprep.subr.mxu0 0.0
    %1205 = vmatpush1.msra.mxu0 0.0
    %1206 = vmatprep.subr.mxu0 0.0
    %1207 = vmatpush1.msra.mxu0 0.0
    %1208 = vmatprep.subr.mxu0 0.0
    %1209 = vmatpush1.msra.mxu0 0.0
    %1210 = vmatprep.subr.mxu0 0.0
    %1211 = vmatpush1.msra.mxu0 0.0
    %1212 = vmatprep.subr.mxu0 0.0
    %1213 = vmatpush1.msra.mxu0 0.0
    %1214 = vmatprep.mubr.f32.mxu0 0.0
    %v1215 = vand.u32 %v108, 4294901760
    %1216 = vmatmul.mubr.f32.gmra.mrb[0].mxu0 %v1215
    %v1217 = vpop.f32.mrb[0].mxu0
    %v1218 = vadd.f32 %v1051, %v1217
    %v1219 = vpop.f32.mrb[0].mxu0
    %1220 = vmatprep.mubr.f32.mxu0 0.0
    %v1221 = vand.u32 %v111, 4294901760
    %1222 = vmatmul.mubr.f32.gmra.mrb[0].mxu0 %v1221
    %v1223 = vpop.f32.mrb[0].mxu0
    %v1224 = vadd.f32 %v1057, %v1223
    %v1225 = vpop.f32.mrb[0].mxu0
    %1226 = vmatprep.mubr.f32.mxu0 0.0
    %v1227 = vand.u32 %v114, 4294901760
    %1228 = vmatmul.mubr.f32.gmra.mrb[0].mxu0 %v1227
    %v1229 = vpop.f32.mrb[0].mxu0
    %v1230 = vadd.f32 %v1063, %v1229
    %v1231 = vpop.f32.mrb[0].mxu0
    %1232 = vmatprep.mubr.f32.mxu0 0.0
    %v1233 = vand.u32 %v117, 4294901760
    %1234 = vmatmul.mubr.f32.gmra.mrb[0].mxu0 %v1233
    %v1235 = vpop.f32.mrb[0].mxu0
    %v1236 = vadd.f32 %v1069, %v1235
    %v1237 = vpop.f32.mrb[0].mxu0
    %1238 = vmatprep.mubr.f32.mxu0 0.0
    %v1239 = vand.u32 %v120, 4294901760
    %1240 = vmatmul.mubr.f32.gmra.mrb[0].mxu0 %v1239
    %v1241 = vpop.f32.mrb[0].mxu0
    %v1242 = vadd.f32 %v1075, %v1241
    %v1243 = vpop.f32.mrb[0].mxu0
    %1244 = vmatprep.mubr.f32.mxu0 0.0
    %v1245 = vand.u32 %v123, 4294901760
    %1246 = vmatmul.mubr.f32.gmra.mrb[0].mxu0 %v1245
    %v1247 = vpop.f32.mrb[0].mxu0
    %v1248 = vadd.f32 %v1081, %v1247
    %v1249 = vpop.f32.mrb[0].mxu0
    %1250 = vmatprep.mubr.f32.mxu0 0.0
    %v1251 = vand.u32 %v126, 4294901760
    %1252 = vmatmul.mubr.f32.gmra.mrb[0].mxu0 %v1251
    %v1253 = vpop.f32.mrb[0].mxu0
    %v1254 = vadd.f32 %v1087, %v1253
    %v1255 = vpop.f32.mrb[0].mxu0
    %1256 = vmatprep.mubr.f32.mxu0 0.0
    %v1257 = vand.u32 %v129, 4294901760
    %1258 = vmatmul.mubr.f32.gmra.mrb[0].mxu0 %v1257
    %v1259 = vpop.f32.mrb[0].mxu0
    %v1260 = vadd.f32 %v1093, %v1259
    %v1261 = vpop.f32.mrb[0].mxu0
    %1262 = vmatprep.mubr.f32.mxu0 0.0
    %v1263 = vand.u32 %v132, 4294901760
    %1264 = vmatmul.mubr.f32.gmra.mrb[0].mxu0 %v1263
    %v1265 = vpop.f32.mrb[0].mxu0
    %v1266 = vadd.f32 %v1099, %v1265
    %v1267 = vpop.f32.mrb[0].mxu0
    %1268 = vmatprep.mubr.f32.mxu0 0.0
    %v1269 = vand.u32 %v135, 4294901760
    %1270 = vmatmul.mubr.f32.gmra.mrb[0].mxu0 %v1269
    %v1271 = vpop.f32.mrb[0].mxu0
    %v1272 = vadd.f32 %v1105, %v1271
    %v1273 = vpop.f32.mrb[0].mxu0
    %1274 = vmatprep.mubr.f32.mxu0 0.0
    %v1275 = vand.u32 %v138, 4294901760
    %1276 = vmatmul.mubr.f32.gmra.mrb[0].mxu0 %v1275
    %v1277 = vpop.f32.mrb[0].mxu0
    %v1278 = vadd.f32 %v1111, %v1277
    %v1279 = vpop.f32.mrb[0].mxu0
    %1280 = vmatprep.mubr.f32.mxu0 0.0
    %v1281 = vand.u32 %v141, 4294901760
    %1282 = vmatmul.mubr.f32.gmra.mrb[0].mxu0 %v1281
    %v1283 = vpop.f32.mrb[0].mxu0
    %v1284 = vadd.f32 %v1117, %v1283
    %v1285 = vpop.f32.mrb[0].mxu0
    %1286 = vmatprep.mubr.f32.mxu0 0.0
    %v1287 = vand.u32 %v144, 4294901760
    %1288 = vmatmul.mubr.f32.gmra.mrb[0].mxu0 %v1287
    %v1289 = vpop.f32.mrb[0].mxu0
    %v1290 = vadd.f32 %v1123, %v1289
    %v1291 = vpop.f32.mrb[0].mxu0
    %1292 = vmatprep.mubr.f32.mxu0 0.0
    %v1293 = vand.u32 %v147, 4294901760
    %1294 = vmatmul.mubr.f32.gmra.mrb[0].mxu0 %v1293
    %v1295 = vpop.f32.mrb[0].mxu0
    %v1296 = vadd.f32 %v1129, %v1295
    %v1297 = vpop.f32.mrb[0].mxu0
    %1298 = vmatprep.mubr.f32.mxu0 0.0
    %v1299 = vand.u32 %v150, 4294901760
    %1300 = vmatmul.mubr.f32.gmra.mrb[0].mxu0 %v1299
    %v1301 = vpop.f32.mrb[0].mxu0
    %v1302 = vadd.f32 %v1135, %v1301
    %v1303 = vpop.f32.mrb[0].mxu0
    %1304 = vmatprep.mubr.f32.mxu0 0.0
    %v1305 = vand.u32 %v153, 4294901760
    %1306 = vmatmul.mubr.f32.gmra.mrb[0].mxu0 %v1305
    %v1307 = vpop.f32.mrb[0].mxu0
    %v1308 = vadd.f32 %v1141, %v1307
    %v1309 = vpop.f32.mrb[0].mxu0
    %1310 = vdwg.mxu0
    %1311 = vst [vmem:[#allocation7] sm:$0xff] %v1218
    %1312 = vst [vmem:[#allocation7 + $0x8] sm:$0xff] %v1224
    %1313 = vst [vmem:[#allocation7 + $0x10] sm:$0xff] %v1230
    %1314 = vst [vmem:[#allocation7 + $0x18] sm:$0xff] %v1236
    %1315 = vst [vmem:[#allocation7 + $0x20] sm:$0xff] %v1242
    %1316 = vst [vmem:[#allocation7 + $0x28] sm:$0xff] %v1248
    %1317 = vst [vmem:[#allocation7 + $0x30] sm:$0xff] %v1254
    %1318 = vst [vmem:[#allocation7 + $0x38] sm:$0xff] %v1260
    %1319 = vst [vmem:[#allocation7 + $0x40] sm:$0xff] %v1266
    %1320 = vst [vmem:[#allocation7 + $0x48] sm:$0xff] %v1272
    %1321 = vst [vmem:[#allocation7 + $0x50] sm:$0xff] %v1278
    %1322 = vst [vmem:[#allocation7 + $0x58] sm:$0xff] %v1284
    %1323 = vst [vmem:[#allocation7 + $0x60] sm:$0xff] %v1290
    %1324 = vst [vmem:[#allocation7 + $0x68] sm:$0xff] %v1296
    %1325 = vst [vmem:[#allocation7 + $0x70] sm:$0xff] %v1302
    %1326 = vst [vmem:[#allocation7 + $0x78] sm:$0xff] %v1308
    // Predicated region
    $region18: #{tpu_custom_call.1} parent=1 // pred_check
      _
    $region19: #{tpu_custom_call.1} parent=1 // pred_check_branch
      %1328 = sbr.rel (0) target = $region21
    $region20: #{tpu_custom_call.1} parent=1 // pred_region
      %s1330 = ssub.s32 2048, 2048
      %1331 = vsyncadd [#allocation4], %s1330
      %s1332 = sshll.u32 [#allocation7], 4
      %s1333 = int_to_ptr.vmem [resolvable:$true] %s1332
      %1338 = dma.vmem_to_hbm [thread:$0]  %s1333, 2048, %s2, [#allocation4], 128, 128, 8
    $region21: #{tpu_custom_call.1} parent=1 // pred_fallthru
      _
    // Predicated region
    $region22: #{tpu_custom_call.1} parent=1 // pred_check
      _
    $region23: #{tpu_custom_call.1} parent=1 // pred_check_branch
      %1340 = sbr.rel (0) target = $region25
    $region24: #{tpu_custom_call.1} parent=1 // pred_region
      %1341 = dma.done [#allocation4], 2048
    $region25: #{tpu_custom_call.1} parent=1 // pred_fallthru
      _
    %1342 = vsyncpa [#allocation3], 1
    %1343 = vsyncpa [#allocation6], 1
    %1344 = vsyncpa [#allocation4], 1

</llo_original>
